<compile_context>
chip_gen: v7x
topology: tpu7x:2x2x1
jax: 0.10.0
libtpu: 0.0.40
codegen_flags: <defaults>
</compile_context>

<pallas_src>
import functools

import jax
import jax.numpy as jnp
from jax.experimental import pallas as pl
from jax.experimental.pallas import tpu as pltpu

ALPHA = 1.0
GAMMA = 2.0
LANES = 128
_MIB = 1 << 20


def _round_up(x, m):
    return ((x + m - 1) // m) * m


def _round_down(x, m):
    return (x // m) * m


def _device_kind():
    try:
        return jax.devices()[0].device_kind.lower()
    except Exception:
        return ""


def _focal_loss_kernel(x_ref, t_ref, o_ref, *, alpha, gamma):
    # Cast to f32 inside the kernel (HBM traffic stays in the native dtype).
    x = x_ref[...].astype(jnp.float32)
    t = t_ref[...].astype(jnp.float32)
    # Numerically-stable BCE-with-logits, reduction='none' (matches PyTorch).
    bce = jnp.maximum(x, 0.0) - x * t + jnp.log1p(jnp.exp(-jnp.abs(x)))
    pt = jnp.exp(-bce)
    u = 1.0 - pt
    g = float(gamma)
    if g == 2.0:
        mod = u * u                      # single VPU multiply, EUP stays at 3 pushes/elem
    elif g == int(g) and g >= 0.0:
        mod = u ** int(g)                # small integer power -> VPU multiplies
    else:
        mod = jnp.power(u, g)            # general fallback (exp/log on EUP)
    o_ref[...] = (alpha * mod * bce).astype(o_ref.dtype)


def _focal_loss_jnp(x, t, alpha=ALPHA, gamma=GAMMA):
    """Plain-jnp reference / tiny-tail path (f32 math, native output dtype)."""
    out_dtype = x.dtype
    xf = x.astype(jnp.float32)
    tf = t.astype(jnp.float32)
    bce = jnp.maximum(xf, 0.0) - xf * tf + jnp.log1p(jnp.exp(-jnp.abs(xf)))
    pt = jnp.exp(-bce)
    return (alpha * (1.0 - pt) ** gamma * bce).astype(out_dtype)


def _focal_loss_2d(x2, t2, *, alpha, gamma, block_rows):
    """Run the elementwise kernel on a lane-dense (rows, 128) layout."""
    rows = x2.shape[0]
    out_dtype = x2.dtype
    itemsizes = (jnp.dtype(x2.dtype).itemsize,
                 jnp.dtype(t2.dtype).itemsize,
                 jnp.dtype(out_dtype).itemsize)
    bytes_per_row = LANES * sum(itemsizes)
    # dtype-aware min sublane multiple: f32 -> 8, bf16 -> 16, int8/fp8 -> 32.
    sub = 32 // min(itemsizes)

    kind = _device_kind()
    two_tc = ("v7" in kind) or ("tpu7" in kind)   # megacore generations

    if block_rows is None:
        # 4 MiB-class tiles where the scoped VMEM default allows it (v6e/v7x),
        # 2 MiB f32 tiles on v5e / unknown chips (16 MiB scoped default).
        block_rows = 8192 if (two_tc or "v6" in kind) else 4096

    # Cap the double-buffered (x + t + out) footprint at ~24 MiB (v7x-safe).
    cap_rows = max(sub, _round_down((24 * _MIB) // (2 * bytes_per_row), sub))
    eff = min(block_rows, cap_rows)
    if eff >= rows:
        eff = rows                         # single full block (always legal)
    else:
        eff = max(sub, _round_down(eff, sub))
    grid = pl.cdiv(rows, eff)

    if two_tc:
        # Megacore only: 2-way split of a single big block / even grid counts,
        # but only when each TensorCore gets >= ~1 MiB so the extra pipeline
        # step is amortized. Single-TC chips (v5e/v6e) never take this branch.
        if grid == 1 and rows * bytes_per_row >= 2 * _MIB:
            eff = min(_round_up(pl.cdiv(rows, 2), sub), rows)
            grid = pl.cdiv(rows, eff)
        elif grid >= 3 and grid % 2 == 1 and rows * bytes_per_row >= 4 * _MIB:
            eff = max(sub, _round_up(pl.cdiv(rows, grid + 1), sub))
            grid = pl.cdiv(rows, eff)

    compiler_kwargs = dict(dimension_semantics=("parallel",))
    vmem_needed = 2 * eff * bytes_per_row          # 2-deep buffered tiles
    if vmem_needed > 12 * _MIB:
        # Above the conservative v5e-safe footprint: state the limit explicitly.
        compiler_kwargs["vmem_limit_bytes"] = int(vmem_needed + 8 * _MIB)

    n = rows * LANES
    cost = pl.CostEstimate(flops=10 * n, transcendentals=3 * n,
                           bytes_accessed=n * sum(itemsizes))

    kernel = functools.partial(_focal_loss_kernel, alpha=alpha, gamma=gamma)
    return pl.pallas_call(
        kernel,
        out_shape=jax.ShapeDtypeStruct((rows, LANES), out_dtype),
        grid_spec=pltpu.PrefetchScalarGridSpec(
            num_scalar_prefetch=0,
            grid=(grid,),
            in_specs=[
                pl.BlockSpec((eff, LANES), lambda i: (i, 0)),
                pl.BlockSpec((eff, LANES), lambda i: (i, 0)),
            ],
            out_specs=pl.BlockSpec((eff, LANES), lambda i: (i, 0)),
        ),
        compiler_params=pltpu.CompilerParams(**compiler_kwargs),
        cost_estimate=cost,
    )(x2, t2)


def focal_loss(inputs, targets, *, alpha=ALPHA, gamma=GAMMA, reduce=False,
               block_rows=None):
    """Focal loss with logits=True. Elementwise; output has the shape of `inputs`."""
    assert inputs.shape == targets.shape, "inputs/targets must match"
    orig_shape = inputs.shape
    out_dtype = inputs.dtype
    n = int(inputs.size)

    if n == 0:
        out = jnp.zeros(orig_shape, out_dtype)
    elif n % LANES == 0:
        # Free reshape (metadata only) -- no pad / slice HBM passes.
        out = _focal_loss_2d(inputs.reshape(-1, LANES),
                             targets.reshape(-1, LANES),
                             alpha=alpha, gamma=gamma,
                             block_rows=block_rows).reshape(orig_shape)
    else:
        # Unaligned size: kernel over the 128-aligned prefix; the <128-element
        # tail is plain jnp. Avoids full-array pad + output-slice HBM passes.
        n_main = n - (n % LANES)
        x_flat = inputs.reshape(-1)
        t_flat = targets.reshape(-1)
        tail = _focal_loss_jnp(x_flat[n_main:], t_flat[n_main:], alpha, gamma)
        if n_main == 0:
            out = tail.reshape(orig_shape)
        else:
            main = _focal_loss_2d(x_flat[:n_main].reshape(-1, LANES),
                                  t_flat[:n_main].reshape(-1, LANES),
                                  alpha=alpha, gamma=gamma,
                                  block_rows=block_rows).reshape(-1)
            out = jnp.concatenate([main, tail]).reshape(orig_shape)

    if reduce:
        # Module default is reduce=False; accumulate the mean in f32 to match
        # PyTorch precision.
        # TODO(synk): fuse the mean into the kernel (f32 accumulator over an
        # 'arbitrary' grid axis) to save the extra HBM read of the output.
        return jnp.mean(out.astype(jnp.float32)).astype(out_dtype)
    return out


if __name__ == "__main__":
    key = jax.random.PRNGKey(0)
    k1, k2, k3, k4 = jax.random.split(key, 4)

    # Small shapes consistent with a BCE-style loss over NCHW maps.
    B, C, H, W = 2, 4, 16, 16
    logits = jax.random.normal(k1, (B, C, H, W), dtype=jnp.float32)
    targets = (jax.random.uniform(k2, (B, C, H, W)) > 0.5).astype(jnp.float32)

    out = focal_loss(logits, targets)
    out = jax.block_until_ready(out)

    ref = _focal_loss_jnp(logits, targets)
    assert out.shape == (B, C, H, W)
    assert out.dtype == logits.dtype
    assert jnp.allclose(out, ref, atol=1e-5, rtol=1e-5), "mismatch vs reference"

    # 128-unaligned numel: exercises the prefix-kernel + jnp-tail path (no pad).
    x_u = jax.random.normal(k3, (8, 130), dtype=jnp.float32)
    t_u = (jax.random.uniform(k4, (8, 130)) > 0.5).astype(jnp.float32)
    out_u = jax.block_until_ready(focal_loss(x_u, t_u))
    assert jnp.allclose(out_u, _focal_loss_jnp(x_u, t_u), atol=1e-5, rtol=1e-5)

    print("KERNEL_OK")
</pallas_src>

<mosaic_0001>
module attributes {stable_mosaic.version = 11 : i64} {
  func.func @_focal_loss_kernel(%arg0: i32, %arg1: memref<16x128xf32, #tpu.memory_space<vmem>>, %arg2: memref<16x128xf32, #tpu.memory_space<vmem>>, %arg3: memref<16x128xf32, #tpu.memory_space<vmem>>) attributes {dimension_semantics = [#tpu.dimension_semantics<parallel>], iteration_bounds = array<i64: 1>, scalar_prefetch = 0 : i64, scratch_operands = 0 : i64, tpu.core_type = #tpu.core_type<tc>, window_params = [{transform_indices = @transform_0, window_bounds = array<i64: 16, 128>}, {transform_indices = @transform_1, window_bounds = array<i64: 16, 128>}, {transform_indices = @transform_2, window_bounds = array<i64: 16, 128>}]} {
    %c0 = arith.constant 0 : index
    %c0_0 = arith.constant 0 : index
    %0 = vector.load %arg1[%c0, %c0_0] : memref<16x128xf32, #tpu.memory_space<vmem>>, vector<16x128xf32>
    %c0_1 = arith.constant 0 : index
    %c0_2 = arith.constant 0 : index
    %1 = vector.load %arg2[%c0_1, %c0_2] : memref<16x128xf32, #tpu.memory_space<vmem>>, vector<16x128xf32>
    %cst = arith.constant 0.000000e+00 : f32
    %2 = vector.broadcast %cst : f32 to vector<16x128xf32>
    %3 = arith.maximumf %0, %2 : vector<16x128xf32>
    %4 = arith.mulf %0, %1 : vector<16x128xf32>
    %5 = arith.subf %3, %4 : vector<16x128xf32>
    %6 = math.absf %0 : vector<16x128xf32>
    %cst_3 = arith.constant 0.000000e+00 : f32
    %7 = vector.broadcast %cst_3 : f32 to vector<16x128xf32>
    %8 = arith.subf %7, %6 : vector<16x128xf32>
    %9 = math.exp %8 : vector<16x128xf32>
    %10 = math.log1p %9 : vector<16x128xf32>
    %11 = arith.addf %5, %10 : vector<16x128xf32>
    %cst_4 = arith.constant 0.000000e+00 : f32
    %12 = vector.broadcast %cst_4 : f32 to vector<16x128xf32>
    %13 = arith.subf %12, %11 : vector<16x128xf32>
    %14 = math.exp %13 : vector<16x128xf32>
    %cst_5 = arith.constant 1.000000e+00 : f32
    %15 = vector.broadcast %cst_5 : f32 to vector<16x128xf32>
    %16 = arith.subf %15, %14 : vector<16x128xf32>
    %17 = arith.mulf %16, %16 : vector<16x128xf32>
    %cst_6 = arith.constant 1.000000e+00 : f32
    %18 = vector.broadcast %cst_6 : f32 to vector<16x128xf32>
    %19 = arith.mulf %18, %17 : vector<16x128xf32>
    %20 = arith.mulf %19, %11 : vector<16x128xf32>
    %c0_7 = arith.constant 0 : index
    %c0_8 = arith.constant 0 : index
    %21 = vector.load %arg3[%c0_7, %c0_8] : memref<16x128xf32, #tpu.memory_space<vmem>>, vector<16x128xf32>
    tpu.vector_store %arg3[%c0_7, %c0_8], %20 {strides = array<i32>} : memref<16x128xf32, #tpu.memory_space<vmem>>, vector<16x128xf32>,
    return
  }
  func.func @transform_0(%arg0: i32) -> (i32, i32) {
    %c0_i32 = arith.constant 0 : i32
    %c0_i32_0 = arith.constant 0 : i32
    return %arg0, %c0_i32 : i32, i32
  }
  func.func @transform_1(%arg0: i32) -> (i32, i32) {
    %c0_i32 = arith.constant 0 : i32
    %c0_i32_0 = arith.constant 0 : i32
    return %arg0, %c0_i32 : i32, i32
  }
  func.func @transform_2(%arg0: i32) -> (i32, i32) {
    %c0_i32 = arith.constant 0 : i32
    %c0_i32_0 = arith.constant 0 : i32
    return %arg0, %c0_i32 : i32, i32
  }
}

</mosaic_0001>

<llo_original>
// kernel: tpu_custom_call.1
$region0: #{tpu_custom_call.1}
  #allocation0 [shape = 'u32[]', space=smem, size = 0x4, offset = 0x4, fixed_abs, tag = 'smem constant byte address 0x4 - core index']
  #allocation1 [shape = 'u32[144,128]{1,0:T(1,128)}', space=vmem, size = 0x12000, scoped, tag = 'internal scratch']
  %s0 = inlined_call_operand.hbm [shape: f32[16,128], index: 0, kind: input, shape index: {}]
  %s1 = inlined_call_operand.hbm [shape: f32[16,128], index: 1, kind: input, shape index: {}]
  %s2 = inlined_call_operand.hbm [shape: f32[16,128], index: 2, kind: output, shape index: {}]
  %s3 = sld [smem:[#allocation0]]
  $region26: #{tpu_custom_call.1} parent=0
    _
  %s5 = ssub.s32 1, %s3
  %s6 = scalar_select 0, %s5, %s3
  $region1: #{tpu_custom_call.1} parent=0
    #allocation2 [shape = 'u8[8192]{0}', space=vmem, size = 0x2000, scoped, tag = 'input window, operand 0, single buffered']
    #allocation3 [shape = 's32[1]{0}', space=sflag, size = 0x4, scoped, tag = 'scoped memory for tpu_custom_call.1']
    #allocation4 [shape = 's32[1]{0}', space=sflag, size = 0x4, scoped, tag = 'scoped memory for tpu_custom_call.1']
    #allocation5 [shape = 'u8[8192]{0}', space=vmem, size = 0x2000, scoped, tag = 'input window, operand 1, single buffered']
    #allocation6 [shape = 's32[1]{0}', space=sflag, size = 0x4, scoped, tag = 'scoped memory for tpu_custom_call.1']
    #allocation7 [shape = 'u8[8192]{0}', space=vmem, size = 0x2000, scoped, tag = 'output window, operand 0, single buffered']
    %7 = vsyncpa [#allocation3], 0
    %8 = vsyncpa [#allocation6], 0
    %9 = vsyncpa [#allocation4], 0
    // Predicated region
    $region2: #{tpu_custom_call.1} parent=1 // pred_check
      _
    $region3: #{tpu_custom_call.1} parent=1 // pred_check_branch
      %11 = sbr.rel (0) target = $region5
    $region4: #{tpu_custom_call.1} parent=1 // pred_region
      %s13 = ssub.s32 256, 256
      %14 = vsyncadd [#allocation3], %s13
      %s15 = sshll.u32 [#allocation2], 4
      %s16 = int_to_ptr.vmem [resolvable:$true] %s15
      %21 = dma.hbm_to_vmem [thread:$0]  %s0, 256, %s16, [#allocation3], 128, 128, 8
    $region5: #{tpu_custom_call.1} parent=1 // pred_fallthru
      _
    // Predicated region
    $region6: #{tpu_custom_call.1} parent=1 // pred_check
      _
    $region7: #{tpu_custom_call.1} parent=1 // pred_check_branch
      %23 = sbr.rel (0) target = $region9
    $region8: #{tpu_custom_call.1} parent=1 // pred_region
      %s25 = ssub.s32 256, 256
      %26 = vsyncadd [#allocation6], %s25
      %s27 = sshll.u32 [#allocation5], 4
      %s28 = int_to_ptr.vmem [resolvable:$true] %s27
      %33 = dma.hbm_to_vmem [thread:$0]  %s1, 256, %s28, [#allocation6], 128, 128, 8
    $region9: #{tpu_custom_call.1} parent=1 // pred_fallthru
      _
    // Predicated region
    $region10: #{tpu_custom_call.1} parent=1 // pred_check
      _
    $region11: #{tpu_custom_call.1} parent=1 // pred_check_branch
      %35 = sbr.rel (0) target = $region13
    $region12: #{tpu_custom_call.1} parent=1 // pred_region
      %36 = dma.done [#allocation3], 256
    $region13: #{tpu_custom_call.1} parent=1 // pred_fallthru
      _
    // Predicated region
    $region14: #{tpu_custom_call.1} parent=1 // pred_check
      _
    $region15: #{tpu_custom_call.1} parent=1 // pred_check_branch
      %38 = sbr.rel (0) target = $region17
    $region16: #{tpu_custom_call.1} parent=1 // pred_region
      %39 = dma.done [#allocation6], 256
    $region17: #{tpu_custom_call.1} parent=1 // pred_fallthru
      _
    %v40 = vld [vmem:[#allocation2] sm:$0xff]
    %v41 = vld [vmem:[#allocation2 + $0x8] sm:$0xff]
    %v42 = vld [vmem:[#allocation5] sm:$0xff]
    %v43 = vld [vmem:[#allocation5 + $0x8] sm:$0xff]
    %v44 = vmax.f32 %v40, 0.0
    %v45 = vmax.f32 %v41, 0.0
    %v46 = vmul.f32 %v40, %v42
    %v47 = vmul.f32 %v41, %v43
    %v48 = vsub.f32 %v44, %v46
    %v49 = vsub.f32 %v45, %v47
    %v50 = vand.u32 2147483647, %v40
    %v51 = vand.u32 2147483647, %v41
    %v52 = vsub.f32 0.0, %v50
    %v53 = vsub.f32 0.0, %v51
    %v54 = vmul.f32 %v52, 1.442695
    %v55 = vpow.pop %v54
    %v56 = vmul.f32 %v53, 1.442695
    %v57 = vpow.pop %v56
    %v58 = vadd.f32 %v55, 1.0
    %v59 = vlog2.pop %v58
    %v60 = vmul.f32 %v59, 0.6931472
    %v61 = vmul.f32 -0.5, %v55
    %v62 = vadd.f32 %v61, 1.0
    %v63 = vmul.f32 %v62, %v55
    %v64 = vand.u32 2147483647, %v55
    %vm65 = vcmp.lt.f32.partialorder %v64, 0.0004427343
    %v66 = vsel %vm65, %v63, %v60
    %v67 = vadd.f32 %v57, 1.0
    %v68 = vlog2.pop %v67
    %v69 = vmul.f32 %v68, 0.6931472
    %v70 = vmul.f32 -0.5, %v57
    %v71 = vadd.f32 %v70, 1.0
    %v72 = vmul.f32 %v71, %v57
    %v73 = vand.u32 2147483647, %v57
    %vm74 = vcmp.lt.f32.partialorder %v73, 0.0004427343
    %v75 = vsel %vm74, %v72, %v69
    %v76 = vadd.f32 %v48, %v66
    %v77 = vadd.f32 %v49, %v75
    %v78 = vsub.f32 0.0, %v76
    %v79 = vsub.f32 0.0, %v77
    %v80 = vmul.f32 %v78, 1.442695
    %v81 = vpow.pop %v80
    %v82 = vmul.f32 %v79, 1.442695
    %v83 = vpow.pop %v82
    %v84 = vsub.f32 1.0, %v81
    %v85 = vsub.f32 1.0, %v83
    %v86 = vmul.f32 %v84, %v84
    %v87 = vmul.f32 %v85, %v85
    %v88 = vmul.f32 %v86, %v76
    %v89 = vmul.f32 %v87, %v77
    %90 = vst [vmem:[#allocation7] sm:$0xff] %v88
    %91 = vst [vmem:[#allocation7 + $0x8] sm:$0xff] %v89
    // Predicated region
    $region18: #{tpu_custom_call.1} parent=1 // pred_check
      _
    $region19: #{tpu_custom_call.1} parent=1 // pred_check_branch
      %93 = sbr.rel (0) target = $region21
    $region20: #{tpu_custom_call.1} parent=1 // pred_region
      %s95 = ssub.s32 256, 256
      %96 = vsyncadd [#allocation4], %s95
      %s97 = sshll.u32 [#allocation7], 4
      %s98 = int_to_ptr.vmem [resolvable:$true] %s97
      %103 = dma.vmem_to_hbm [thread:$0]  %s98, 256, %s2, [#allocation4], 128, 128, 8
    $region21: #{tpu_custom_call.1} parent=1 // pred_fallthru
      _
    // Predicated region
    $region22: #{tpu_custom_call.1} parent=1 // pred_check
      _
    $region23: #{tpu_custom_call.1} parent=1 // pred_check_branch
      %105 = sbr.rel (0) target = $region25
    $region24: #{tpu_custom_call.1} parent=1 // pred_region
      %106 = dma.done [#allocation4], 256
    $region25: #{tpu_custom_call.1} parent=1 // pred_fallthru
      _
    %107 = vsyncpa [#allocation3], 1
    %108 = vsyncpa [#allocation6], 1
    %109 = vsyncpa [#allocation4], 1

</llo_original>
